<compile_context>
chip_gen: v6e
topology: v6e:2x2x1
jax: 0.10.0
libtpu: 0.0.40
codegen_flags: <defaults>
</compile_context>

<pallas_src>
import jax
import jax.numpy as jnp
from jax.experimental import pallas as pl
from jax.experimental.pallas import tpu as pltpu

H0 = 256
H1 = 128
H_OUT = 1
H_OUT_PAD = 8      # small lane pad of the final layer (32 B/row of output writeback)


def _discriminator_kernel(x_ref, w0_ref, b0_ref, w1_ref, b1_ref, w2_ref, b2_ref, o_ref):
    """Full MLP forward for one batch tile, entirely in VMEM (all f32).

    x_ref : (TB, D) f32         w0: (D, 256)  f32   b0: (1, 256) f32
                                w1: (256,128) f32   b1: (1, 128) f32
                                w2: (128, 8)  f32   b2: (1, 8)   f32 (cols 1.. zero)
    o_ref : (TB, 8) f32  (only column 0 is meaningful; sliced in the wrapper)
    """
    x = x_ref[...]

    # hidden0: Linear + LeakyReLU(0.2)
    h0 = jnp.dot(x, w0_ref[...], preferred_element_type=jnp.float32) + b0_ref[...]
    h0 = jnp.where(h0 > 0, h0, 0.2 * h0)

    # hidden1: Linear + LeakyReLU(0.2)
    h1 = jnp.dot(h0, w1_ref[...], preferred_element_type=jnp.float32) + b1_ref[...]
    h1 = jnp.where(h1 > 0, h1, 0.2 * h1)

    # out: Linear (padded to 8 output columns; no activation)
    out = jnp.dot(h1, w2_ref[...], preferred_element_type=jnp.float32) + b2_ref[...]
    o_ref[...] = out.astype(o_ref.dtype)


def _choose_tile_b(B, D):
    """Pick the per-step batch tile.

    Large enough to amortize the ~0.35 us/step pipeline overhead (cap 4096, and the
    x tile capped at ~4 MiB per buffer so double-buffering stays far under every
    generation's scoped VMEM limit), but with >= 2 grid steps at real batch sizes so
    the 'parallel' batch axis can shard across v7x's two TensorCores.
    """
    bytes_per_row = max(int(D), 1) * 4
    vmem_rows = max(8, (4 << 20) // bytes_per_row)     # ~4 MiB of x per buffer
    tb = min(max(int(B), 8), 4096, vmem_rows)
    if tb >= B and B > 16:
        tb = pl.cdiv(B, 2)                             # keep both TCs busy on v7x
    tb = max(8, ((int(tb) + 7) // 8) * 8)              # sublane multiple
    return tb


def prepare_params(params):
    """One-time layout prep (hoisted out of the forward): pad the 1-wide output
    layer to H_OUT_PAD lanes and make everything f32. Call once, reuse per step."""
    f32 = jnp.float32
    w2 = jnp.pad(params["w2"].astype(f32), ((0, 0), (0, H_OUT_PAD - H_OUT)))
    b2 = jnp.pad(params["b2"].astype(f32), ((0, 0), (0, H_OUT_PAD - H_OUT)))
    return {
        "w0": params["w0"].astype(f32), "b0": params["b0"].astype(f32),
        "w1": params["w1"].astype(f32), "b1": params["b1"].astype(f32),
        "w2": w2, "b2": b2,
    }


def discriminator_forward(x, kparams, *, tile_b=None):
    """Run the DiscriminatorNet forward via a single Pallas kernel.

    x       : (B, polymer_dim) float32
    kparams : output of prepare_params()
    returns : (B, 1) float32
    """
    B, D = x.shape
    if tile_b is None:
        tile_b = _choose_tile_b(B, D)
    tile_b = max(8, ((int(tile_b) + 7) // 8) * 8)
    n_steps = pl.cdiv(B, tile_b)

    w0, b0 = kparams["w0"], kparams["b0"]
    w1, b1 = kparams["w1"], kparams["b1"]
    w2, b2 = kparams["w2"], kparams["b2"]

    flops = 2 * B * (D * H0 + H0 * H1 + H1 * H_OUT_PAD)
    bytes_accessed = (x.size * 4
                      + (w0.size + w1.size + w2.size) * 4
                      + (b0.size + b1.size + b2.size) * 4
                      + B * H_OUT_PAD * 4)

    out = pl.pallas_call(
        _discriminator_kernel,
        out_shape=jax.ShapeDtypeStruct((B, H_OUT_PAD), jnp.float32),
        grid=(n_steps,),
        in_specs=[
            # x: tiled over batch; last dim = full array dim, so no feature padding.
            pl.BlockSpec((tile_b, D), lambda i: (i, 0)),
            # Weights/biases: constant index_map -> VMEM-resident across grid steps.
            # (pipeline_mode=pl.Buffered(1) would drop their second buffer; skipped —
            #  weights are tiny here and correctness/compile robustness wins.)
            pl.BlockSpec((D, H0), lambda i: (0, 0)),           # w0
            pl.BlockSpec((1, H0), lambda i: (0, 0)),           # b0
            pl.BlockSpec((H0, H1), lambda i: (0, 0)),          # w1
            pl.BlockSpec((1, H1), lambda i: (0, 0)),           # b1
            pl.BlockSpec((H1, H_OUT_PAD), lambda i: (0, 0)),   # w2 (8-lane pad)
            pl.BlockSpec((1, H_OUT_PAD), lambda i: (0, 0)),    # b2 (8-lane pad)
        ],
        out_specs=pl.BlockSpec((tile_b, H_OUT_PAD), lambda i: (i, 0)),
        compiler_params=pltpu.CompilerParams(
            dimension_semantics=("parallel",),
        ),
        cost_estimate=pl.CostEstimate(
            flops=flops, transcendentals=0, bytes_accessed=bytes_accessed),
    )(x, w0, b0, w1, b1, w2, b2)

    # Drop the 7 padded output lanes (and rely on row-independence for any ragged
    # last tile: padding rows never influence valid rows and are never returned).
    return out[:B, :H_OUT]


def init_params(key, polymer_dim):
    """Deterministic synthetic init matching nn.Linear shapes.

    Same U(-1/sqrt(fan_in), 1/sqrt(fan_in)) range as torch default, via JAX PRNG.
    """
    ks = jax.random.split(key, 6)

    def linear(kw, kb, fan_in, fan_out):
        bound = 1.0 / jnp.sqrt(jnp.float32(fan_in))
        w = jax.random.uniform(kw, (fan_in, fan_out), jnp.float32, -bound, bound)
        b = jax.random.uniform(kb, (1, fan_out), jnp.float32, -bound, bound)
        return w, b

    w0, b0 = linear(ks[0], ks[1], polymer_dim, H0)
    w1, b1 = linear(ks[2], ks[3], H0, H1)
    w2, b2 = linear(ks[4], ks[5], H1, H_OUT)
    return {"w0": w0, "b0": b0, "w1": w1, "b1": b1, "w2": w2, "b2": b2}


def _reference_forward(x, p):
    """Pure-JAX f32 reference mirroring the PyTorch module."""
    h0 = jnp.dot(x, p["w0"], preferred_element_type=jnp.float32) + p["b0"]
    h0 = jnp.where(h0 > 0, h0, 0.2 * h0)
    h1 = jnp.dot(h0, p["w1"], preferred_element_type=jnp.float32) + p["b1"]
    h1 = jnp.where(h1 > 0, h1, 0.2 * h1)
    return jnp.dot(h1, p["w2"], preferred_element_type=jnp.float32) + p["b2"]


if __name__ == "__main__":
    key = jax.random.PRNGKey(0)
    k_x, k_p = jax.random.split(key)

    batch = 8
    polymer_dim = 32  # consistent with Linear(polymer_dim, 256)

    x = jax.random.normal(k_x, (batch, polymer_dim), dtype=jnp.float32)
    params = init_params(k_p, polymer_dim)
    kparams = prepare_params(params)   # one-time layout prep, hoisted out of forward

    out = discriminator_forward(x, kparams)
    out = jax.block_until_ready(out)

    ref = _reference_forward(x, params)
    assert out.shape == (batch, 1), out.shape
    assert jnp.allclose(out, ref, atol=1e-3, rtol=1e-3), "mismatch vs reference"

    print("KERNEL_OK")
</pallas_src>

<mosaic_0001>
module attributes {stable_mosaic.version = 11 : i64} {
  func.func @_discriminator_kernel(%arg0: i32, %arg1: memref<8x32xf32, #tpu.memory_space<vmem>>, %arg2: memref<32x256xf32, #tpu.memory_space<vmem>>, %arg3: memref<1x256xf32, #tpu.memory_space<vmem>>, %arg4: memref<256x128xf32, #tpu.memory_space<vmem>>, %arg5: memref<1x128xf32, #tpu.memory_space<vmem>>, %arg6: memref<128x8xf32, #tpu.memory_space<vmem>>, %arg7: memref<1x8xf32, #tpu.memory_space<vmem>>, %arg8: memref<8x8xf32, #tpu.memory_space<vmem>>) attributes {dimension_semantics = [#tpu.dimension_semantics<parallel>], iteration_bounds = array<i64: 1>, scalar_prefetch = 0 : i64, scratch_operands = 0 : i64, tpu.core_type = #tpu.core_type<tc>, window_params = [{transform_indices = @transform_0, window_bounds = array<i64: 8, 32>}, {pipeline_mode = #tpu.pipeline_mode<synchronous>, transform_indices = @transform_1, window_bounds = array<i64: 32, 256>}, {pipeline_mode = #tpu.pipeline_mode<synchronous>, transform_indices = @transform_2, window_bounds = array<i64: 1, 256>}, {pipeline_mode = #tpu.pipeline_mode<synchronous>, transform_indices = @transform_3, window_bounds = array<i64: 256, 128>}, {pipeline_mode = #tpu.pipeline_mode<synchronous>, transform_indices = @transform_4, window_bounds = array<i64: 1, 128>}, {pipeline_mode = #tpu.pipeline_mode<synchronous>, transform_indices = @transform_5, window_bounds = array<i64: 128, 8>}, {pipeline_mode = #tpu.pipeline_mode<synchronous>, transform_indices = @transform_6, window_bounds = array<i64: 1, 8>}, {transform_indices = @transform_7, window_bounds = array<i64: 8, 8>}]} {
    %c0 = arith.constant 0 : index
    %c0_0 = arith.constant 0 : index
    %0 = vector.load %arg1[%c0, %c0_0] : memref<8x32xf32, #tpu.memory_space<vmem>>, vector<8x32xf32>
    %c0_1 = arith.constant 0 : index
    %c0_2 = arith.constant 0 : index
    %1 = vector.load %arg2[%c0_1, %c0_2] : memref<32x256xf32, #tpu.memory_space<vmem>>, vector<32x256xf32>
    %cst = arith.constant dense<0.000000e+00> : vector<8x256xf32>
    %2 = tpu.matmul %0, %1, %cst {dimension_numbers = #tpu.dot_dimension_numbers<[1], [0], [0], [1], [0, 0, 1, 1], [], []>} : vector<8x32xf32>, vector<32x256xf32>, vector<8x256xf32> -> vector<8x256xf32>
    %c0_3 = arith.constant 0 : index
    %c0_4 = arith.constant 0 : index
    %3 = vector.load %arg3[%c0_3, %c0_4] : memref<1x256xf32, #tpu.memory_space<vmem>>, vector<1x256xf32>
    %4 = vector.broadcast %3 : vector<1x256xf32> to vector<8x256xf32>
    %5 = arith.addf %2, %4 : vector<8x256xf32>
    %cst_5 = arith.constant 0.000000e+00 : f32
    %6 = vector.broadcast %cst_5 : f32 to vector<8x256xf32>
    %7 = arith.cmpf ogt, %5, %6 : vector<8x256xf32>
    %cst_6 = arith.constant 2.000000e-01 : f32
    %8 = vector.broadcast %cst_6 : f32 to vector<8x256xf32>
    %9 = arith.mulf %8, %5 : vector<8x256xf32>
    %10 = arith.select %7, %5, %9 : vector<8x256xi1>, vector<8x256xf32>
    %c0_7 = arith.constant 0 : index
    %c0_8 = arith.constant 0 : index
    %11 = vector.load %arg4[%c0_7, %c0_8] : memref<256x128xf32, #tpu.memory_space<vmem>>, vector<256x128xf32>
    %cst_9 = arith.constant dense<0.000000e+00> : vector<8x128xf32>
    %12 = tpu.matmul %10, %11, %cst_9 {dimension_numbers = #tpu.dot_dimension_numbers<[1], [0], [0], [1], [0, 0, 1, 1], [], []>} : vector<8x256xf32>, vector<256x128xf32>, vector<8x128xf32> -> vector<8x128xf32>
    %c0_10 = arith.constant 0 : index
    %c0_11 = arith.constant 0 : index
    %13 = vector.load %arg5[%c0_10, %c0_11] : memref<1x128xf32, #tpu.memory_space<vmem>>, vector<1x128xf32>
    %14 = vector.broadcast %13 : vector<1x128xf32> to vector<8x128xf32>
    %15 = arith.addf %12, %14 : vector<8x128xf32>
    %cst_12 = arith.constant 0.000000e+00 : f32
    %16 = vector.broadcast %cst_12 : f32 to vector<8x128xf32>
    %17 = arith.cmpf ogt, %15, %16 : vector<8x128xf32>
    %cst_13 = arith.constant 2.000000e-01 : f32
    %18 = vector.broadcast %cst_13 : f32 to vector<8x128xf32>
    %19 = arith.mulf %18, %15 : vector<8x128xf32>
    %20 = arith.select %17, %15, %19 : vector<8x128xi1>, vector<8x128xf32>
    %c0_14 = arith.constant 0 : index
    %c0_15 = arith.constant 0 : index
    %21 = vector.load %arg6[%c0_14, %c0_15] : memref<128x8xf32, #tpu.memory_space<vmem>>, vector<128x8xf32>
    %cst_16 = arith.constant dense<0.000000e+00> : vector<8x8xf32>
    %22 = tpu.matmul %20, %21, %cst_16 {dimension_numbers = #tpu.dot_dimension_numbers<[1], [0], [0], [1], [0, 0, 1, 1], [], []>} : vector<8x128xf32>, vector<128x8xf32>, vector<8x8xf32> -> vector<8x8xf32>
    %c0_17 = arith.constant 0 : index
    %c0_18 = arith.constant 0 : index
    %23 = vector.load %arg7[%c0_17, %c0_18] : memref<1x8xf32, #tpu.memory_space<vmem>>, vector<1x8xf32>
    %24 = vector.broadcast %23 : vector<1x8xf32> to vector<8x8xf32>
    %25 = arith.addf %22, %24 : vector<8x8xf32>
    %c0_19 = arith.constant 0 : index
    %c0_20 = arith.constant 0 : index
    %26 = vector.load %arg8[%c0_19, %c0_20] : memref<8x8xf32, #tpu.memory_space<vmem>>, vector<8x8xf32>
    tpu.vector_store %arg8[%c0_19, %c0_20], %25 {strides = array<i32>} : memref<8x8xf32, #tpu.memory_space<vmem>>, vector<8x8xf32>,
    return
  }
  func.func @transform_0(%arg0: i32) -> (i32, i32) {
    %c0_i32 = arith.constant 0 : i32
    %c0_i32_0 = arith.constant 0 : i32
    return %arg0, %c0_i32 : i32, i32
  }
  func.func @transform_1(%arg0: i32) -> (i32, i32) {
    %c0_i32 = arith.constant 0 : i32
    %c0_i32_0 = arith.constant 0 : i32
    %c0_i32_1 = arith.constant 0 : i32
    return %c0_i32, %c0_i32_0 : i32, i32
  }
  func.func @transform_2(%arg0: i32) -> (i32, i32) {
    %c0_i32 = arith.constant 0 : i32
    %c0_i32_0 = arith.constant 0 : i32
    %c0_i32_1 = arith.constant 0 : i32
    return %c0_i32, %c0_i32_0 : i32, i32
  }
  func.func @transform_3(%arg0: i32) -> (i32, i32) {
    %c0_i32 = arith.constant 0 : i32
    %c0_i32_0 = arith.constant 0 : i32
    %c0_i32_1 = arith.constant 0 : i32
    return %c0_i32, %c0_i32_0 : i32, i32
  }
  func.func @transform_4(%arg0: i32) -> (i32, i32) {
    %c0_i32 = arith.constant 0 : i32
    %c0_i32_0 = arith.constant 0 : i32
    %c0_i32_1 = arith.constant 0 : i32
    return %c0_i32, %c0_i32_0 : i32, i32
  }
  func.func @transform_5(%arg0: i32) -> (i32, i32) {
    %c0_i32 = arith.constant 0 : i32
    %c0_i32_0 = arith.constant 0 : i32
    %c0_i32_1 = arith.constant 0 : i32
    return %c0_i32, %c0_i32_0 : i32, i32
  }
  func.func @transform_6(%arg0: i32) -> (i32, i32) {
    %c0_i32 = arith.constant 0 : i32
    %c0_i32_0 = arith.constant 0 : i32
    %c0_i32_1 = arith.constant 0 : i32
    return %c0_i32, %c0_i32_0 : i32, i32
  }
  func.func @transform_7(%arg0: i32) -> (i32, i32) {
    %c0_i32 = arith.constant 0 : i32
    %c0_i32_0 = arith.constant 0 : i32
    return %arg0, %c0_i32 : i32, i32
  }
}

</mosaic_0001>

<llo_original>
// kernel: tpu_custom_call.1
$region0: #{tpu_custom_call.1}
  #allocation0 [shape = 'u32[]', space=smem, size = 0x4, offset = 0x4, fixed_abs, tag = 'smem constant byte address 0x4 - core index']
  #allocation1 [shape = 'u32[144,128]{1,0:T(1,128)}', space=vmem, size = 0x12000, scoped, tag = 'internal scratch']
  %s0 = inlined_call_operand.vmem [shape: f32[8,32], index: 0, kind: input, shape index: {}]
  %s1 = inlined_call_operand.vmem [shape: f32[32,256], index: 1, kind: input, shape index: {}]
  %s2 = inlined_call_operand.vmem [shape: f32[1,256], index: 2, kind: input, shape index: {}]
  %s3 = inlined_call_operand.hbm [shape: f32[256,128], index: 3, kind: input, shape index: {}]
  %s4 = inlined_call_operand.vmem [shape: f32[1,128], index: 4, kind: input, shape index: {}]
  %s5 = inlined_call_operand.vmem [shape: f32[128,8], index: 5, kind: input, shape index: {}]
  %s6 = inlined_call_operand.vmem [shape: f32[1,8], index: 6, kind: input, shape index: {}]
  %s7 = inlined_call_operand.hbm [shape: f32[8,8], index: 7, kind: output, shape index: {}]
  %s8 = sld [smem:[#allocation0]]
  $region42: #{tpu_custom_call.1} parent=0
    _
  %s10 = ssub.s32 1, %s8
  %s11 = scalar_select 0, %s10, %s8
  $region1: #{tpu_custom_call.1} parent=0
    #allocation2 [shape = 'u8[131072]{0}', space=vmem, size = 0x20000, scoped, tag = 'input window, operand 3, single buffered']
    #allocation3 [shape = 's32[1]{0}', space=sflag, size = 0x4, scoped, tag = 'scoped memory for tpu_custom_call.1']
    #allocation4 [shape = 's32[1]{0}', space=sflag, size = 0x4, scoped, tag = 'scoped memory for tpu_custom_call.1']
    #allocation5 [shape = 'u8[4096]{0}', space=vmem, size = 0x1000, scoped, tag = 'output window, operand 0, single buffered']
    %12 = vsyncpa [#allocation3], 0
    %13 = vsyncpa [#allocation4], 0
    // Predicated region
    $region2: #{tpu_custom_call.1} parent=1 // pred_check
      _
    $region3: #{tpu_custom_call.1} parent=1 // pred_check_branch
      %15 = sbr.rel (0) target = $region5
    $region4: #{tpu_custom_call.1} parent=1 // pred_region
      _
    $region5: #{tpu_custom_call.1} parent=1 // pred_fallthru
      _
    // Predicated region
    $region6: #{tpu_custom_call.1} parent=1 // pred_check
      _
    $region7: #{tpu_custom_call.1} parent=1 // pred_check_branch
      %17 = sbr.rel (0) target = $region9
    $region8: #{tpu_custom_call.1} parent=1 // pred_region
      _
    $region9: #{tpu_custom_call.1} parent=1 // pred_fallthru
      _
    // Predicated region
    $region10: #{tpu_custom_call.1} parent=1 // pred_check
      _
    $region11: #{tpu_custom_call.1} parent=1 // pred_check_branch
      %19 = sbr.rel (0) target = $region13
    $region12: #{tpu_custom_call.1} parent=1 // pred_region
      _
    $region13: #{tpu_custom_call.1} parent=1 // pred_fallthru
      _
    // Predicated region
    $region14: #{tpu_custom_call.1} parent=1 // pred_check
      _
    $region15: #{tpu_custom_call.1} parent=1 // pred_check_branch
      %21 = sbr.rel (0) target = $region17
    $region16: #{tpu_custom_call.1} parent=1 // pred_region
      %s23 = ssub.s32 4096, 4096
      %24 = vsyncadd [#allocation3], %s23
      %s25 = sshll.u32 [#allocation2], 4
      %s26 = int_to_ptr.vmem [resolvable:$true] %s25
      %31 = dma.hbm_to_vmem [thread:$0]  %s3, 4096, %s26, [#allocation3], 128, 128, 8
    $region17: #{tpu_custom_call.1} parent=1 // pred_fallthru
      _
    // Predicated region
    $region18: #{tpu_custom_call.1} parent=1 // pred_check
      _
    $region19: #{tpu_custom_call.1} parent=1 // pred_check_branch
      %33 = sbr.rel (0) target = $region21
    $region20: #{tpu_custom_call.1} parent=1 // pred_region
      _
    $region21: #{tpu_custom_call.1} parent=1 // pred_fallthru
      _
    // Predicated region
    $region22: #{tpu_custom_call.1} parent=1 // pred_check
      _
    $region23: #{tpu_custom_call.1} parent=1 // pred_check_branch
      %35 = sbr.rel (0) target = $region25
    $region24: #{tpu_custom_call.1} parent=1 // pred_region
      _
    $region25: #{tpu_custom_call.1} parent=1 // pred_fallthru
      _
    // Predicated region
    $region26: #{tpu_custom_call.1} parent=1 // pred_check
      _
    $region27: #{tpu_custom_call.1} parent=1 // pred_check_branch
      %37 = sbr.rel (0) target = $region29
    $region28: #{tpu_custom_call.1} parent=1 // pred_region
      _
    $region29: #{tpu_custom_call.1} parent=1 // pred_fallthru
      _
    // Predicated region
    $region30: #{tpu_custom_call.1} parent=1 // pred_check
      _
    $region31: #{tpu_custom_call.1} parent=1 // pred_check_branch
      %39 = sbr.rel (0) target = $region33
    $region32: #{tpu_custom_call.1} parent=1 // pred_region
      %40 = dma.done [#allocation3], 4096
    $region33: #{tpu_custom_call.1} parent=1 // pred_fallthru
      _
    %v41 = vld [vmem:[%s0] sm:$0xff]
    %v42 = vld [vmem:[%s1] sm:$0xff]
    %v43 = vld [vmem:[%s1 + $0x8] sm:$0xff]
    %v44 = vld [vmem:[%s1 + $0x10] sm:$0xff]
    %v45 = vld [vmem:[%s1 + $0x18] sm:$0xff]
    %v46 = vld [vmem:[%s1 + $0x20] sm:$0xff]
    %v47 = vld [vmem:[%s1 + $0x28] sm:$0xff]
    %v48 = vld [vmem:[%s1 + $0x30] sm:$0xff]
    %v49 = vld [vmem:[%s1 + $0x38] sm:$0xff]
    %v50 = vld [vmem:[%s2] sm:$0x3]
    %v52 = vlaneseq
    %v53 = vshrl.u32 %v52, 7
    %v54 = vsub.s32 0, %v53
    %v55 = vrot.slane %v50, %v54
    %v56 = vlaneseq
    %v57 = vshrl.u32 %v56, 7
    %v58 = vsub.s32 1, %v57
    %v59 = vrot.slane %v50, %v58
    %vm62 = vcmask 261120
    %v64 = vsel %vm62, %v41, 0
    %66 = vmatprep.subr.mxu0 0.0
    %67 = vmatpush1.msra.mxu0 0.0
    %68 = vmatprep.subr.mxu0 0.0
    %69 = vmatpush1.msra.mxu0 0.0
    %70 = vmatprep.subr.mxu0 0.0
    %71 = vmatpush1.msra.mxu0 0.0
    %72 = vmatprep.subr.mxu0 0.0
    %73 = vmatpush1.msra.mxu0 0.0
    %74 = vmatprep.subr.mxu0 0.0
    %75 = vmatpush1.msra.mxu0 0.0
    %76 = vmatprep.subr.mxu0 0.0
    %77 = vmatpush1.msra.mxu0 0.0
    %78 = vmatprep.subr.mxu0 0.0
    %79 = vmatpush1.msra.mxu0 0.0
    %80 = vmatprep.subr.mxu0 0.0
    %81 = vmatpush1.msra.mxu0 0.0
    %82 = vmatprep.subr.mxu0 0.0
    %83 = vmatpush1.msra.mxu0 0.0
    %84 = vmatprep.subr.mxu0 0.0
    %85 = vmatpush1.msra.mxu0 0.0
    %86 = vmatprep.subr.mxu0 0.0
    %87 = vmatpush1.msra.mxu0 0.0
    %88 = vmatprep.subr.mxu0 0.0
    %89 = vmatpush1.msra.mxu0 0.0
    %90 = vmatprep.subr.mxu0 %v49
    %91 = vmatpush1.msra.mxu0 %v48
    %92 = vmatprep.subr.mxu0 %v47
    %93 = vmatpush1.msra.mxu0 %v46
    %94 = vmatprep.subr.mxu0 %v45
    %95 = vmatpush1.msra.mxu0 %v44
    %96 = vmatprep.subr.mxu0 %v43
    %97 = vmatpush1.msra.mxu0 %v42
    %98 = vmatprep.subr.mxu0 0.0
    %99 = vmatpush2.msra.mxu0 0.0
    %100 = vmatprep.subr.mxu0 0.0
    %101 = vmatpush2.msra.mxu0 0.0
    %102 = vmatprep.subr.mxu0 0.0
    %103 = vmatpush2.msra.mxu0 0.0
    %104 = vmatprep.subr.mxu0 0.0
    %105 = vmatpush2.msra.mxu0 0.0
    %106 = vmatprep.subr.mxu0 0.0
    %107 = vmatpush2.msra.mxu0 0.0
    %108 = vmatprep.subr.mxu0 0.0
    %109 = vmatpush2.msra.mxu0 0.0
    %110 = vmatprep.subr.mxu0 0.0
    %111 = vmatpush2.msra.mxu0 0.0
    %112 = vmatprep.subr.mxu0 0.0
    %113 = vmatpush2.msra.mxu0 0.0
    %114 = vmatprep.subr.mxu0 0.0
    %115 = vmatpush2.msra.mxu0 0.0
    %116 = vmatprep.subr.mxu0 0.0
    %117 = vmatpush2.msra.mxu0 0.0
    %118 = vmatprep.subr.mxu0 0.0
    %119 = vmatpush2.msra.mxu0 0.0
    %120 = vmatprep.subr.mxu0 0.0
    %121 = vmatpush2.msra.mxu0 0.0
    %122 = vmatprep.subr.mxu0 0.0
    %123 = vmatpush2.msra.mxu0 0.0
    %124 = vmatprep.subr.mxu0 0.0
    %125 = vmatpush2.msra.mxu0 0.0
    %126 = vmatprep.subr.mxu0 0.0
    %127 = vmatpush2.msra.mxu0 0.0
    %128 = vmatprep.subr.mxu0 0.0
    %129 = vmatpush2.msra.mxu0 0.0
    %130 = vmatprep.mubr.f32.mxu0 0.0
    %131 = vmatmul.mubr.f32.gmra.mxu0 %v64
    %v132 = vpop.f32.mrf.mxu0
    %v133 = vadd.f32 %v55, %v132
    %v134 = vpop.f32.mrf.mxu0
    %v135 = vadd.f32 %v59, %v134
    %136 = vdwg.mxu0
    %vm137 = vcmp.gt.f32.partialorder %v133, 0.0
    %vm138 = vcmp.gt.f32.partialorder %v135, 0.0
    %v139 = vmul.f32 %v133, 0.2
    %v140 = vmul.f32 %v135, 0.2
    %v141 = vsel %vm137, %v133, %v139
    %v142 = vsel %vm138, %v135, %v140
    %v143 = vld [vmem:[#allocation2] sm:$0xff]
    %v144 = vld [vmem:[#allocation2 + $0x8] sm:$0xff]
    %v145 = vld [vmem:[#allocation2 + $0x10] sm:$0xff]
    %v146 = vld [vmem:[#allocation2 + $0x18] sm:$0xff]
    %v147 = vld [vmem:[#allocation2 + $0x20] sm:$0xff]
    %v148 = vld [vmem:[#allocation2 + $0x28] sm:$0xff]
    %v149 = vld [vmem:[#allocation2 + $0x30] sm:$0xff]
    %v150 = vld [vmem:[#allocation2 + $0x38] sm:$0xff]
    %v151 = vld [vmem:[#allocation2 + $0x40] sm:$0xff]
    %v152 = vld [vmem:[#allocation2 + $0x48] sm:$0xff]
    %v153 = vld [vmem:[#allocation2 + $0x50] sm:$0xff]
    %v154 = vld [vmem:[#allocation2 + $0x58] sm:$0xff]
    %v155 = vld [vmem:[#allocation2 + $0x60] sm:$0xff]
    %v156 = vld [vmem:[#allocation2 + $0x68] sm:$0xff]
    %v157 = vld [vmem:[#allocation2 + $0x70] sm:$0xff]
    %v158 = vld [vmem:[#allocation2 + $0x78] sm:$0xff]
    %v159 = vld [vmem:[#allocation2 + $0x80] sm:$0xff]
    %v160 = vld [vmem:[#allocation2 + $0x88] sm:$0xff]
    %v161 = vld [vmem:[#allocation2 + $0x90] sm:$0xff]
    %v162 = vld [vmem:[#allocation2 + $0x98] sm:$0xff]
    %v163 = vld [vmem:[#allocation2 + $0xa0] sm:$0xff]
    %v164 = vld [vmem:[#allocation2 + $0xa8] sm:$0xff]
    %v165 = vld [vmem:[#allocation2 + $0xb0] sm:$0xff]
    %v166 = vld [vmem:[#allocation2 + $0xb8] sm:$0xff]
    %v167 = vld [vmem:[#allocation2 + $0xc0] sm:$0xff]
    %v168 = vld [vmem:[#allocation2 + $0xc8] sm:$0xff]
    %v169 = vld [vmem:[#allocation2 + $0xd0] sm:$0xff]
    %v170 = vld [vmem:[#allocation2 + $0xd8] sm:$0xff]
    %v171 = vld [vmem:[#allocation2 + $0xe0] sm:$0xff]
    %v172 = vld [vmem:[#allocation2 + $0xe8] sm:$0xff]
    %v173 = vld [vmem:[#allocation2 + $0xf0] sm:$0xff]
    %v174 = vld [vmem:[#allocation2 + $0xf8] sm:$0xff]
    %v175 = vld [vmem:[%s4] sm:$0x1]
    %v177 = vlaneseq
    %v178 = vshrl.u32 %v177, 7
    %v179 = vsub.s32 0, %v178
    %v180 = vrot.slane %v175, %v179
    %182 = vmatprep.subr.mxu0 0.0
    %183 = vmatpush1.msra.mxu0 %v158
    %184 = vmatprep.subr.mxu0 0.0
    %185 = vmatpush1.msra.mxu0 %v157
    %186 = vmatprep.subr.mxu0 0.0
    %187 = vmatpush1.msra.mxu0 %v156
    %188 = vmatprep.subr.mxu0 0.0
    %189 = vmatpush1.msra.mxu0 %v155
    %190 = vmatprep.subr.mxu0 0.0
    %191 = vmatpush1.msra.mxu0 %v154
    %192 = vmatprep.subr.mxu0 0.0
    %193 = vmatpush1.msra.mxu0 %v153
    %194 = vmatprep.subr.mxu0 0.0
    %195 = vmatpush1.msra.mxu0 %v152
    %196 = vmatprep.subr.mxu0 0.0
    %197 = vmatpush1.msra.mxu0 %v151
    %198 = vmatprep.subr.mxu0 0.0
    %199 = vmatpush1.msra.mxu0 %v150
    %200 = vmatprep.subr.mxu0 0.0
    %201 = vmatpush1.msra.mxu0 %v149
    %202 = vmatprep.subr.mxu0 0.0
    %203 = vmatpush1.msra.mxu0 %v148
    %204 = vmatprep.subr.mxu0 0.0
    %205 = vmatpush1.msra.mxu0 %v147
    %206 = vmatprep.subr.mxu0 0.0
    %207 = vmatpush1.msra.mxu0 %v146
    %208 = vmatprep.subr.mxu0 0.0
    %209 = vmatpush1.msra.mxu0 %v145
    %210 = vmatprep.subr.mxu0 0.0
    %211 = vmatpush1.msra.mxu0 %v144
    %212 = vmatprep.subr.mxu0 0.0
    %213 = vmatpush1.msra.mxu0 %v143
    %214 = vmatprep.subr.mxu0 0.0
    %215 = vmatpush2.msra.mxu0 %v174
    %216 = vmatprep.subr.mxu0 0.0
    %217 = vmatpush2.msra.mxu0 %v173
    %218 = vmatprep.subr.mxu0 0.0
    %219 = vmatpush2.msra.mxu0 %v172
    %220 = vmatprep.subr.mxu0 0.0
    %221 = vmatpush2.msra.mxu0 %v171
    %222 = vmatprep.subr.mxu0 0.0
    %223 = vmatpush2.msra.mxu0 %v170
    %224 = vmatprep.subr.mxu0 0.0
    %225 = vmatpush2.msra.mxu0 %v169
    %226 = vmatprep.subr.mxu0 0.0
    %227 = vmatpush2.msra.mxu0 %v168
    %228 = vmatprep.subr.mxu0 0.0
    %229 = vmatpush2.msra.mxu0 %v167
    %230 = vmatprep.subr.mxu0 0.0
    %231 = vmatpush2.msra.mxu0 %v166
    %232 = vmatprep.subr.mxu0 0.0
    %233 = vmatpush2.msra.mxu0 %v165
    %234 = vmatprep.subr.mxu0 0.0
    %235 = vmatpush2.msra.mxu0 %v164
    %236 = vmatprep.subr.mxu0 0.0
    %237 = vmatpush2.msra.mxu0 %v163
    %238 = vmatprep.subr.mxu0 0.0
    %239 = vmatpush2.msra.mxu0 %v162
    %240 = vmatprep.subr.mxu0 0.0
    %241 = vmatpush2.msra.mxu0 %v161
    %242 = vmatprep.subr.mxu0 0.0
    %243 = vmatpush2.msra.mxu0 %v160
    %244 = vmatprep.subr.mxu0 0.0
    %245 = vmatpush2.msra.mxu0 %v159
    %246 = vmatprep.mubr.f32.mxu0 %v142
    %247 = vmatmul.mubr.f32.gmra.mxu0 %v141
    %v248 = vpop.f32.mrf.mxu0
    %v249 = vadd.f32 %v180, %v248
    %v250 = vpop.f32.mrf.mxu0
    %251 = vdwg.mxu0
    %vm252 = vcmp.gt.f32.partialorder %v249, 0.0
    %v253 = vmul.f32 %v249, 0.2
    %v254 = vsel %vm252, %v249, %v253
    %v255 = vld [vmem:[%s5] sm:$0xff]
    %v256 = vld [vmem:[%s5 + $0x8] sm:$0xff]
    %v257 = vld [vmem:[%s5 + $0x10] sm:$0xff]
    %v258 = vld [vmem:[%s5 + $0x18] sm:$0xff]
    %v259 = vld [vmem:[%s5 + $0x20] sm:$0xff]
    %v260 = vld [vmem:[%s5 + $0x28] sm:$0xff]
    %v261 = vld [vmem:[%s5 + $0x30] sm:$0xff]
    %v262 = vld [vmem:[%s5 + $0x38] sm:$0xff]
    %v263 = vld [vmem:[%s5 + $0x40] sm:$0xff]
    %v264 = vld [vmem:[%s5 + $0x48] sm:$0xff]
    %v265 = vld [vmem:[%s5 + $0x50] sm:$0xff]
    %v266 = vld [vmem:[%s5 + $0x58] sm:$0xff]
    %v267 = vld [vmem:[%s5 + $0x60] sm:$0xff]
    %v268 = vld [vmem:[%s5 + $0x68] sm:$0xff]
    %v269 = vld [vmem:[%s5 + $0x70] sm:$0xff]
    %v270 = vld [vmem:[%s5 + $0x78] sm:$0xff]
    %v271 = vld [vmem:[%s6] sm:$0x1]
    %v273 = vlaneseq
    %v274 = vshrl.u32 %v273, 7
    %v275 = vsub.s32 0, %v274
    %v276 = vrot.slane %v271, %v275
    %278 = vmatprep.subr.mxu0 0.0
    %279 = vmatpush1.msra.mxu0 %v270
    %280 = vmatprep.subr.mxu0 0.0
    %281 = vmatpush1.msra.mxu0 %v269
    %282 = vmatprep.subr.mxu0 0.0
    %283 = vmatpush1.msra.mxu0 %v268
    %284 = vmatprep.subr.mxu0 0.0
    %285 = vmatpush1.msra.mxu0 %v267
    %286 = vmatprep.subr.mxu0 0.0
    %287 = vmatpush1.msra.mxu0 %v266
    %288 = vmatprep.subr.mxu0 0.0
    %289 = vmatpush1.msra.mxu0 %v265
    %290 = vmatprep.subr.mxu0 0.0
    %291 = vmatpush1.msra.mxu0 %v264
    %292 = vmatprep.subr.mxu0 0.0
    %293 = vmatpush1.msra.mxu0 %v263
    %294 = vmatprep.subr.mxu0 0.0
    %295 = vmatpush1.msra.mxu0 %v262
    %296 = vmatprep.subr.mxu0 0.0
    %297 = vmatpush1.msra.mxu0 %v261
    %298 = vmatprep.subr.mxu0 0.0
    %299 = vmatpush1.msra.mxu0 %v260
    %300 = vmatprep.subr.mxu0 0.0
    %301 = vmatpush1.msra.mxu0 %v259
    %302 = vmatprep.subr.mxu0 0.0
    %303 = vmatpush1.msra.mxu0 %v258
    %304 = vmatprep.subr.mxu0 0.0
    %305 = vmatpush1.msra.mxu0 %v257
    %306 = vmatprep.subr.mxu0 0.0
    %307 = vmatpush1.msra.mxu0 %v256
    %308 = vmatprep.subr.mxu0 0.0
    %309 = vmatpush1.msra.mxu0 %v255
    %310 = vmatprep.subr.mxu0 0.0
    %311 = vmatpush2.msra.mxu0 0.0
    %312 = vmatprep.subr.mxu0 0.0
    %313 = vmatpush2.msra.mxu0 0.0
    %314 = vmatprep.subr.mxu0 0.0
    %315 = vmatpush2.msra.mxu0 0.0
    %316 = vmatprep.subr.mxu0 0.0
    %317 = vmatpush2.msra.mxu0 0.0
    %318 = vmatprep.subr.mxu0 0.0
    %319 = vmatpush2.msra.mxu0 0.0
    %320 = vmatprep.subr.mxu0 0.0
    %321 = vmatpush2.msra.mxu0 0.0
    %322 = vmatprep.subr.mxu0 0.0
    %323 = vmatpush2.msra.mxu0 0.0
    %324 = vmatprep.subr.mxu0 0.0
    %325 = vmatpush2.msra.mxu0 0.0
    %326 = vmatprep.subr.mxu0 0.0
    %327 = vmatpush2.msra.mxu0 0.0
    %328 = vmatprep.subr.mxu0 0.0
    %329 = vmatpush2.msra.mxu0 0.0
    %330 = vmatprep.subr.mxu0 0.0
    %331 = vmatpush2.msra.mxu0 0.0
    %332 = vmatprep.subr.mxu0 0.0
    %333 = vmatpush2.msra.mxu0 0.0
    %334 = vmatprep.subr.mxu0 0.0
    %335 = vmatpush2.msra.mxu0 0.0
    %336 = vmatprep.subr.mxu0 0.0
    %337 = vmatpush2.msra.mxu0 0.0
    %338 = vmatprep.subr.mxu0 0.0
    %339 = vmatpush2.msra.mxu0 0.0
    %340 = vmatprep.subr.mxu0 0.0
    %341 = vmatpush2.msra.mxu0 0.0
    %342 = vmatprep.mubr.f32.mxu0 0.0
    %343 = vmatmul.mubr.f32.gmra.mxu0 %v254
    %v344 = vpop.f32.mrf.mxu0
    %v345 = vadd.f32 %v276, %v344
    %v346 = vpop.f32.mrf.mxu0
    %347 = vdwg.mxu0
    %vm348 = vcmask 64512
    %349 = vst.msk [vmem:[#allocation5] sm:$0xff] %vm348, %v345
    // Predicated region
    $region34: #{tpu_custom_call.1} parent=1 // pred_check
      _
    $region35: #{tpu_custom_call.1} parent=1 // pred_check_branch
      %351 = sbr.rel (0) target = $region37
    $region36: #{tpu_custom_call.1} parent=1 // pred_region
      %s353 = ssub.s32 128, 128
      %354 = vsyncadd [#allocation4], %s353
      %s356 = sshll.u32 [#allocation5], 4
      %s357 = int_to_ptr.vmem [resolvable:$true] %s356
      %359 = dma.vmem_to_hbm [thread:$0]  %s357, 128, %s7, [#allocation4]
    $region37: #{tpu_custom_call.1} parent=1 // pred_fallthru
      _
    // Predicated region
    $region38: #{tpu_custom_call.1} parent=1 // pred_check
      _
    $region39: #{tpu_custom_call.1} parent=1 // pred_check_branch
      %361 = sbr.rel (0) target = $region41
    $region40: #{tpu_custom_call.1} parent=1 // pred_region
      %362 = dma.done [#allocation4], 128
    $region41: #{tpu_custom_call.1} parent=1 // pred_fallthru
      _
    %363 = vsyncpa [#allocation3], 1
    %364 = vsyncpa [#allocation4], 1

</llo_original>
